<compile_context>
chip_gen: v7x
topology: tpu7x:2x2x1
jax: 0.10.0
libtpu: 0.0.40
codegen_flags: <defaults>
</compile_context>

<pallas_src>
import functools

import jax
import jax.numpy as jnp
from jax.experimental import pallas as pl
from jax.experimental.pallas import tpu as pltpu

NEG_SLOPE = 0.01   # PyTorch nn.LeakyReLU default
DP = 8             # lane-padded feature width: D features + ones column + zeros


def _lrelu(x):
    # max(x, a*x) == LeakyReLU for 0 < a < 1; 2 VPU ops vs cmp+select+mul.
    return jnp.maximum(x, NEG_SLOPE * x)


def deepsets_kernel(feat_ref, mask_ref, p1_ref, p2_ref, out_ref, *,
                    n_set, dim_hidden, mxu_dtype):
    H = dim_hidden
    tb = mask_ref.shape[0]
    cast = lambda a: a.astype(mxu_dtype)

    x = feat_ref[...]                       # (tb*N, DP) f32, ones col at D
    m = mask_ref[...]                       # (tb, N)    f32

    # Packed weight slab 1 (all section starts are multiples of 8 rows).
    w1a = p1_ref[0:DP, :]                               # (DP, H): w1 | b1 | 0
    w2 = p1_ref[DP:DP + H, :]                           # (H, H)
    b2 = p1_ref[DP + H:DP + H + 1, :]                   # (1, H)
    r1m = p1_ref[2 * DP + H:2 * DP + 2 * H, :]          # (H, H)
    r1s = p1_ref[2 * DP + 2 * H:2 * DP + 3 * H, :]      # (H, H)
    rb1 = p1_ref[2 * DP + 3 * H:2 * DP + 3 * H + 1, :]  # (1, H)
    # Packed slab 2: last rho layer, lane-padded to CP.
    r2 = p2_ref[0:H, :]                                 # (H, CP)
    rb2 = p2_ref[H:H + 1, :]                            # (1, CP)

    # phi: two MXU matmuls over the whole row tile (bias-1 folded into w1a).
    h = _lrelu(jnp.dot(cast(x), cast(w1a), preferred_element_type=jnp.float32))
    h = _lrelu(jnp.dot(cast(h), cast(w2), preferred_element_type=jnp.float32)
               + b2)                                            # (tb*N, H) f32

    # Per-tile masked pooling on the VPU/XLU (O(tb*N*H); hides under the MXU).
    h3 = h.reshape(tb, n_set, H)
    h_sum = jnp.sum(h3 * m[:, :, None], axis=1)                 # (tb, H)
    m_sum = jnp.sum(m, axis=1, keepdims=True)                   # (tb, 1)
    # NOTE: all-zero mask rows give 1/0 = inf (NaN after *0), matching PyTorch.
    h_mean = h_sum * pl.reciprocal(m_sum, approx=False)         # (tb, H)

    # rho: concat([h_mean, h_sum]) @ W1 == h_mean @ W_top + h_sum @ W_bot.
    z = _lrelu(jnp.dot(cast(h_mean), cast(r1m), preferred_element_type=jnp.float32)
               + jnp.dot(cast(h_sum), cast(r1s), preferred_element_type=jnp.float32)
               + rb1)                                           # (tb, H)
    f = _lrelu(jnp.dot(cast(z), cast(r2), preferred_element_type=jnp.float32)
               + rb2)                                           # (tb, CP) lane-dense
    out_ref[...] = f.astype(out_ref.dtype)


def deepsets_forward(features, mask, packed, *, dim_hidden, num_classes,
                     batch_tile=8, mxu_dtype=jnp.float32):
    """features: (B, N, D) f32; mask: (B, N) f32 or None; packed = (p1, p2)."""
    B, N, D = features.shape
    H, C = dim_hidden, num_classes
    CP = ((C + 127) // 128) * 128
    p1, p2 = packed
    assert D + 1 <= DP, (D, DP)

    tb = min(batch_tile, B)
    assert B % tb == 0 and (tb % 8 == 0 or tb == B), (B, tb)

    if mask is None:
        mask = jnp.ones((B, N), dtype=features.dtype)

    # Fold batch/set axes and append the bias ones-column + zero lane padding
    # (keeps the packed weight slab 8-row aligned and gives the MXU K=DP).
    feat_flat = features.reshape(B * N, D)
    feat_aug = jnp.concatenate(
        [feat_flat,
         jnp.ones((B * N, 1), features.dtype),
         jnp.zeros((B * N, DP - D - 1), features.dtype)], axis=-1)

    kernel = functools.partial(deepsets_kernel, n_set=N, dim_hidden=H,
                               mxu_dtype=mxu_dtype)

    out = pl.pallas_call(
        kernel,
        out_shape=jax.ShapeDtypeStruct((B, CP), jnp.float32),
        grid=(B // tb,),
        in_specs=[
            pl.BlockSpec((tb * N, DP), lambda i: (i, 0)),   # pipelined tiles
            pl.BlockSpec((tb, N), lambda i: (i, 0)),        # lane-dense mask
            pl.BlockSpec(p1.shape, lambda i: (0, 0)),       # resident weights
            pl.BlockSpec(p2.shape, lambda i: (0, 0)),
        ],
        out_specs=pl.BlockSpec((tb, CP), lambda i: (i, 0)),
        compiler_params=pltpu.CompilerParams(
            dimension_semantics=("parallel",),
            vmem_limit_bytes=32 * 1024 * 1024),
    )(feat_aug, mask, p1, p2)

    return out[:, :C]


def init_params(key, dim, dim_hidden, num_classes):
    """Deterministic synthetic params (shapes mirror the PyTorch __init__)."""
    ks = jax.random.split(key, 8)
    s = 0.1
    w1 = s * jax.random.normal(ks[0], (dim, dim_hidden), jnp.float32)
    b1 = s * jax.random.normal(ks[1], (1, dim_hidden), jnp.float32)
    w2 = s * jax.random.normal(ks[2], (dim_hidden, dim_hidden), jnp.float32)
    b2 = s * jax.random.normal(ks[3], (1, dim_hidden), jnp.float32)
    r1 = s * jax.random.normal(ks[4], (2 * dim_hidden, dim_hidden), jnp.float32)
    rb1 = s * jax.random.normal(ks[5], (1, dim_hidden), jnp.float32)
    r2 = s * jax.random.normal(ks[6], (dim_hidden, num_classes), jnp.float32)
    rb2 = s * jax.random.normal(ks[7], (1, num_classes), jnp.float32)
    return {"w1": w1, "b1": b1, "w2": w2, "b2": b2,
            "r1": r1, "rb1": rb1, "r2": r2, "rb2": rb2}


def pack_params(params, dim, dim_hidden, num_classes):
    """One-time packing of the 9 weight/bias tensors into 2 aligned slabs
    (hoisted out of the per-call path)."""
    H, C = dim_hidden, num_classes
    CP = ((C + 127) // 128) * 128
    zrow = lambda n, w=H: jnp.zeros((n, w), jnp.float32)
    p1 = jnp.concatenate([
        params["w1"], params["b1"], zrow(DP - dim - 1),   # rows [0, DP)
        params["w2"],                                     # [DP, DP+H)
        params["b2"], zrow(DP - 1),                       # [DP+H, 2DP+H)
        params["r1"][:H],                                 # [2DP+H, 2DP+2H)
        params["r1"][H:],                                 # [2DP+2H, 2DP+3H)
        params["rb1"], zrow(DP - 1),                      # [2DP+3H, 3DP+3H)
    ], axis=0)
    p2 = jnp.concatenate([
        jnp.pad(params["r2"], ((0, 0), (0, CP - C))),     # [0, H)
        jnp.pad(params["rb2"], ((0, 0), (0, CP - C))),    # row H
        zrow(DP - 1, CP),
    ], axis=0)
    return p1, p2


def deepsets_reference(features, mask, params):
    """Pure-JAX reference matching the PyTorch forward exactly."""
    if mask is None:
        mask = jnp.ones_like(features[..., 0])
    m = mask[..., None]
    h = _lrelu(features @ params["w1"] + params["b1"])
    h = _lrelu(h @ params["w2"] + params["b2"])
    h_sum = (h * m).sum(1)
    h_mean = h_sum / m.sum(1)
    pooled = jnp.concatenate([h_mean, h_sum], axis=1)
    z = _lrelu(pooled @ params["r1"] + params["rb1"])
    return _lrelu(z @ params["r2"] + params["rb2"])


if __name__ == "__main__":
    B, N, D = 16, 8, 3         # batch, set size, point feature dim
    H, C = 32, 2               # dim_hidden, num_classes

    key = jax.random.PRNGKey(0)
    kf, km, kp = jax.random.split(key, 3)

    features = jax.random.normal(kf, (B, N, D), jnp.float32)
    # binary mask with at least one valid element per set (avoids 0/0)
    mask = (jax.random.uniform(km, (B, N)) > 0.3).astype(jnp.float32)
    mask = mask.at[:, 0].set(1.0)

    params = init_params(kp, D, H, C)
    packed = pack_params(params, D, H, C)   # one-time, outside the call path

    fwd = functools.partial(deepsets_forward, dim_hidden=H, num_classes=C,
                            batch_tile=8)

    # f32 MXU path: bit-close to the pure-JAX reference.
    out = jax.block_until_ready(fwd(features, mask, packed))
    ref = deepsets_reference(features, mask, params)
    assert out.shape == (B, C), out.shape
    assert jnp.allclose(out, ref, atol=1e-5, rtol=1e-5), (out, ref)

    # mask=None path (all elements valid).
    out_nm = jax.block_until_ready(fwd(features, None, packed))
    ref_nm = deepsets_reference(features, None, params)
    assert jnp.allclose(out_nm, ref_nm, atol=1e-5, rtol=1e-5)

    # bf16 MXU operands (v5e/v6e/v7x throughput path); f32 accumulate/epilogue.
    out_bf = jax.block_until_ready(fwd(features, mask, packed,
                                       mxu_dtype=jnp.bfloat16))
    assert jnp.allclose(out_bf, ref, atol=3e-2, rtol=3e-2)

    print("KERNEL_OK")
</pallas_src>

<mosaic_0001>
module attributes {stable_mosaic.version = 11 : i64} {
  func.func @deepsets_kernel(%arg0: i32, %arg1: memref<64x8xf32, #tpu.memory_space<vmem>>, %arg2: memref<8x8xf32, #tpu.memory_space<vmem>>, %arg3: memref<120x32xf32, #tpu.memory_space<vmem>>, %arg4: memref<40x128xf32, #tpu.memory_space<vmem>>, %arg5: memref<8x128xf32, #tpu.memory_space<vmem>>) attributes {dimension_semantics = [#tpu.dimension_semantics<parallel>], iteration_bounds = array<i64: 2>, scalar_prefetch = 0 : i64, scratch_operands = 0 : i64, tpu.core_type = #tpu.core_type<tc>, window_params = [{transform_indices = @transform_0, window_bounds = array<i64: 64, 8>}, {transform_indices = @transform_1, window_bounds = array<i64: 8, 8>}, {pipeline_mode = #tpu.pipeline_mode<synchronous>, transform_indices = @transform_2, window_bounds = array<i64: 120, 32>}, {pipeline_mode = #tpu.pipeline_mode<synchronous>, transform_indices = @transform_3, window_bounds = array<i64: 40, 128>}, {transform_indices = @transform_4, window_bounds = array<i64: 8, 128>}]} {
    %c0 = arith.constant 0 : index
    %c0_0 = arith.constant 0 : index
    %0 = vector.load %arg1[%c0, %c0_0] : memref<64x8xf32, #tpu.memory_space<vmem>>, vector<64x8xf32>
    %c0_1 = arith.constant 0 : index
    %c0_2 = arith.constant 0 : index
    %1 = vector.load %arg2[%c0_1, %c0_2] : memref<8x8xf32, #tpu.memory_space<vmem>>, vector<8x8xf32>
    %c0_3 = arith.constant 0 : index
    %c0_4 = arith.constant 0 : index
    %2 = vector.load %arg3[%c0_3, %c0_4] : memref<120x32xf32, #tpu.memory_space<vmem>>, vector<8x32xf32>
    %c8 = arith.constant 8 : index
    %c0_5 = arith.constant 0 : index
    %3 = vector.load %arg3[%c8, %c0_5] : memref<120x32xf32, #tpu.memory_space<vmem>>, vector<32x32xf32>
    %c40 = arith.constant 40 : index
    %c0_6 = arith.constant 0 : index
    %4 = vector.load %arg3[%c40, %c0_6] : memref<120x32xf32, #tpu.memory_space<vmem>>, vector<1x32xf32>
    %c48 = arith.constant 48 : index
    %c0_7 = arith.constant 0 : index
    %5 = vector.load %arg3[%c48, %c0_7] : memref<120x32xf32, #tpu.memory_space<vmem>>, vector<32x32xf32>
    %c80 = arith.constant 80 : index
    %c0_8 = arith.constant 0 : index
    %6 = vector.load %arg3[%c80, %c0_8] : memref<120x32xf32, #tpu.memory_space<vmem>>, vector<32x32xf32>
    %c112 = arith.constant 112 : index
    %c0_9 = arith.constant 0 : index
    %7 = vector.load %arg3[%c112, %c0_9] : memref<120x32xf32, #tpu.memory_space<vmem>>, vector<1x32xf32>
    %c0_10 = arith.constant 0 : index
    %c0_11 = arith.constant 0 : index
    %8 = vector.load %arg4[%c0_10, %c0_11] : memref<40x128xf32, #tpu.memory_space<vmem>>, vector<32x128xf32>
    %c32 = arith.constant 32 : index
    %c0_12 = arith.constant 0 : index
    %9 = vector.load %arg4[%c32, %c0_12] : memref<40x128xf32, #tpu.memory_space<vmem>>, vector<1x128xf32>
    %cst = arith.constant dense<0.000000e+00> : vector<64x32xf32>
    %10 = tpu.matmul %0, %2, %cst {dimension_numbers = #tpu.dot_dimension_numbers<[1], [0], [0], [1], [0, 0, 1, 1], [], []>} : vector<64x8xf32>, vector<8x32xf32>, vector<64x32xf32> -> vector<64x32xf32>
    %cst_13 = arith.constant 0.00999999977 : f32
    %11 = vector.broadcast %cst_13 : f32 to vector<64x32xf32>
    %12 = arith.mulf %11, %10 : vector<64x32xf32>
    %13 = arith.maximumf %10, %12 : vector<64x32xf32>
    %cst_14 = arith.constant dense<0.000000e+00> : vector<64x32xf32>
    %14 = tpu.matmul %13, %3, %cst_14 {dimension_numbers = #tpu.dot_dimension_numbers<[1], [0], [0], [1], [0, 0, 1, 1], [], []>} : vector<64x32xf32>, vector<32x32xf32>, vector<64x32xf32> -> vector<64x32xf32>
    %15 = vector.broadcast %4 : vector<1x32xf32> to vector<64x32xf32>
    %16 = arith.addf %14, %15 : vector<64x32xf32>
    %cst_15 = arith.constant 0.00999999977 : f32
    %17 = vector.broadcast %cst_15 : f32 to vector<64x32xf32>
    %18 = arith.mulf %17, %16 : vector<64x32xf32>
    %19 = arith.maximumf %16, %18 : vector<64x32xf32>
    %20 = vector.shape_cast %19 : vector<64x32xf32> to vector<8x8x32xf32>
    %21 = vector.shape_cast %1 : vector<8x8xf32> to vector<8x8x1xf32>
    %22 = vector.broadcast %21 : vector<8x8x1xf32> to vector<8x8x32xf32>
    %23 = arith.mulf %20, %22 : vector<8x8x32xf32>
    %cst_16 = arith.constant dense<0.000000e+00> : vector<8x32xf32>
    %24 = vector.multi_reduction <add>, %23, %cst_16 [1] : vector<8x8x32xf32> to vector<8x32xf32>
    %cst_17 = arith.constant dense<0.000000e+00> : vector<8xf32>
    %25 = vector.multi_reduction <add>, %1, %cst_17 [1] : vector<8x8xf32> to vector<8xf32>
    %26 = vector.shape_cast %25 : vector<8xf32> to vector<8x1xf32>
    %27 = tpu.reciprocal %26 : vector<8x1xf32> -> vector<8x1xf32>
    %28 = vector.broadcast %27 : vector<8x1xf32> to vector<8x32xf32>
    %29 = arith.mulf %24, %28 : vector<8x32xf32>
    %cst_18 = arith.constant dense<0.000000e+00> : vector<8x32xf32>
    %30 = tpu.matmul %29, %5, %cst_18 {dimension_numbers = #tpu.dot_dimension_numbers<[1], [0], [0], [1], [0, 0, 1, 1], [], []>} : vector<8x32xf32>, vector<32x32xf32>, vector<8x32xf32> -> vector<8x32xf32>
    %cst_19 = arith.constant dense<0.000000e+00> : vector<8x32xf32>
    %31 = tpu.matmul %24, %6, %cst_19 {dimension_numbers = #tpu.dot_dimension_numbers<[1], [0], [0], [1], [0, 0, 1, 1], [], []>} : vector<8x32xf32>, vector<32x32xf32>, vector<8x32xf32> -> vector<8x32xf32>
    %32 = arith.addf %30, %31 : vector<8x32xf32>
    %33 = vector.broadcast %7 : vector<1x32xf32> to vector<8x32xf32>
    %34 = arith.addf %32, %33 : vector<8x32xf32>
    %cst_20 = arith.constant 0.00999999977 : f32
    %35 = vector.broadcast %cst_20 : f32 to vector<8x32xf32>
    %36 = arith.mulf %35, %34 : vector<8x32xf32>
    %37 = arith.maximumf %34, %36 : vector<8x32xf32>
    %cst_21 = arith.constant dense<0.000000e+00> : vector<8x128xf32>
    %38 = tpu.matmul %37, %8, %cst_21 {dimension_numbers = #tpu.dot_dimension_numbers<[1], [0], [0], [1], [0, 0, 1, 1], [], []>} : vector<8x32xf32>, vector<32x128xf32>, vector<8x128xf32> -> vector<8x128xf32>
    %39 = vector.broadcast %9 : vector<1x128xf32> to vector<8x128xf32>
    %40 = arith.addf %38, %39 : vector<8x128xf32>
    %cst_22 = arith.constant 0.00999999977 : f32
    %41 = vector.broadcast %cst_22 : f32 to vector<8x128xf32>
    %42 = arith.mulf %41, %40 : vector<8x128xf32>
    %43 = arith.maximumf %40, %42 : vector<8x128xf32>
    %c0_23 = arith.constant 0 : index
    %c0_24 = arith.constant 0 : index
    %44 = vector.load %arg5[%c0_23, %c0_24] : memref<8x128xf32, #tpu.memory_space<vmem>>, vector<8x128xf32>
    tpu.vector_store %arg5[%c0_23, %c0_24], %43 {strides = array<i32>} : memref<8x128xf32, #tpu.memory_space<vmem>>, vector<8x128xf32>,
    return
  }
  func.func @transform_0(%arg0: i32) -> (i32, i32) {
    %c0_i32 = arith.constant 0 : i32
    %c0_i32_0 = arith.constant 0 : i32
    return %arg0, %c0_i32 : i32, i32
  }
  func.func @transform_1(%arg0: i32) -> (i32, i32) {
    %c0_i32 = arith.constant 0 : i32
    %c0_i32_0 = arith.constant 0 : i32
    return %arg0, %c0_i32 : i32, i32
  }
  func.func @transform_2(%arg0: i32) -> (i32, i32) {
    %c0_i32 = arith.constant 0 : i32
    %c0_i32_0 = arith.constant 0 : i32
    %c0_i32_1 = arith.constant 0 : i32
    return %c0_i32, %c0_i32_0 : i32, i32
  }
  func.func @transform_3(%arg0: i32) -> (i32, i32) {
    %c0_i32 = arith.constant 0 : i32
    %c0_i32_0 = arith.constant 0 : i32
    %c0_i32_1 = arith.constant 0 : i32
    return %c0_i32, %c0_i32_0 : i32, i32
  }
  func.func @transform_4(%arg0: i32) -> (i32, i32) {
    %c0_i32 = arith.constant 0 : i32
    %c0_i32_0 = arith.constant 0 : i32
    return %arg0, %c0_i32 : i32, i32
  }
}

</mosaic_0001>

<llo_original>
// kernel: tpu_custom_call.1
$region0: #{tpu_custom_call.1}
  #allocation0 [shape = 'u32[]', space=smem, size = 0x4, offset = 0x4, fixed_abs, tag = 'smem constant byte address 0x4 - core index']
  #allocation1 [shape = 'u32[144,128]{1,0:T(1,128)}', space=vmem, size = 0x12000, scoped, tag = 'internal scratch']
  %s0 = inlined_call_operand.vmem [shape: f32[128,8], index: 0, kind: input, shape index: {}]
  %s1 = inlined_call_operand.vmem [shape: f32[16,8], index: 1, kind: input, shape index: {}]
  %s2 = inlined_call_operand.vmem [shape: f32[120,32], index: 2, kind: input, shape index: {}]
  %s3 = inlined_call_operand.vmem [shape: f32[40,128], index: 3, kind: input, shape index: {}]
  %s4 = inlined_call_operand.hbm [shape: f32[16,128], index: 4, kind: output, shape index: {}]
  %s5 = sld [smem:[#allocation0]]
  $region49: #{tpu_custom_call.1} parent=0
    _
  %s7 = ssub.s32 1, %s5
  %s8 = scalar_select 0, %s7, %s5
  $region1: #{tpu_custom_call.1} parent=0
    #allocation2 [shape = 'u8[8192]{0}', space=vmem, size = 0x2000, scoped, tag = 'output window, operand 0']
    #allocation3 [shape = 's32[2]{0}', space=sflag, size = 0x8, scoped, tag = 'scoped memory for tpu_custom_call.1']
    %9 = vsyncpa [#allocation3], 0
    %s10 = scalar_lea.sflag [#allocation3], 1
    %11 = vsyncpa %s10, 0
    loop: start=0, step=1, limit=4
    $region2: #{tpu_custom_call.1} parent=1 // loop_pre_header
      _
    $region3: #{tpu_custom_call.1} parent=1 // loop_header
      %s13 = sphi 0, %s17
      %p14 = scmp.ge.s32.totalorder %s13, 4
      %s23 = sphi 0, %s25
      %s26 = sphi 0, %s23
      %s27 = sphi 0, %s26
      %s43 = sphi 0, %s27
      %s49 = sphi 0, %s51
      %s52 = sphi 0, %s49
      %s53 = sphi 0, %s52
      %s69 = sphi 0, %s53
      %s73 = sphi 0, %s73
      %s75 = sphi 0, %s73
      %s76 = sphi 0, %s75
      %s90 = sphi 0, %s76
      %s94 = sphi 0, %s94
      %s96 = sphi 0, %s94
      %s97 = sphi 0, %s96
      %s111 = sphi 0, %s97
      %s117 = sphi 0, %s119
      %s120 = sphi 0, %s117
      %s121 = sphi 0, %s120
      %s137 = sphi 0, %s121
    $region4: #{tpu_custom_call.1} parent=1 // loop_header_branch
      %16 = sbr.rel (%p14) target = $region8
    $region5: #{tpu_custom_call.1} parent=1 // loop_body
      %s18 = ssub.s32 %s13, 1
      %s19 = ssub.s32 %s13, 2
      %s20 = sadd.s32 %s13, 1
      %s21 = ssub.s32 %s13, %s20
      %p22 = scmp.eq.s32.totalorder %s21, 0
      %s24 = sadd.s32 %s23, 1
      %s25 = scalar_select %p22, %s23, %s24
      %p28 = pneg %p22
      %p29 = scmp.eq.s32.totalorder %s13, 1
      %p30 = por %p28, %p29
      %p31 = scmp.ne.s32.totalorder %s23, %s26
      %p32 = scmp.eq.s32.totalorder %s13, 0
      %p33 = por %p31, %p32
      %p34 = scmp.ne.s32.totalorder %s23, %s26
      %p35 = scmp.eq.s32.totalorder %s18, 1
      %p36 = por %p34, %p35
      %p37 = scmp.ne.s32.totalorder %s26, %s27
      %p38 = scmp.eq.s32.totalorder %s18, 0
      %p39 = por %p37, %p38
      %p40 = scmp.ne.s32.totalorder %s26, %s27
      %p41 = scmp.eq.s32.totalorder %s19, 1
      %p42 = por %p40, %p41
      %p44 = scmp.ne.s32.totalorder %s27, %s43
      %p45 = scmp.eq.s32.totalorder %s19, 0
      %p46 = por %p44, %p45
      %s47 = ssub.s32 %s13, %s20
      %p48 = scmp.eq.s32.totalorder %s47, 0
      %s50 = sadd.s32 %s49, 1
      %s51 = scalar_select %p48, %s49, %s50
      %p54 = pneg %p48
      %p55 = scmp.eq.s32.totalorder %s13, 1
      %p56 = por %p54, %p55
      %p57 = scmp.ne.s32.totalorder %s49, %s52
      %p58 = scmp.eq.s32.totalorder %s13, 0
      %p59 = por %p57, %p58
      %p60 = scmp.ne.s32.totalorder %s49, %s52
      %p61 = scmp.eq.s32.totalorder %s18, 1
      %p62 = por %p60, %p61
      %p63 = scmp.ne.s32.totalorder %s52, %s53
      %p64 = scmp.eq.s32.totalorder %s18, 0
      %p65 = por %p63, %p64
      %p66 = scmp.ne.s32.totalorder %s52, %s53
      %p67 = scmp.eq.s32.totalorder %s19, 1
      %p68 = por %p66, %p67
      %p70 = scmp.ne.s32.totalorder %s53, %s69
      %p71 = scmp.eq.s32.totalorder %s19, 0
      %p72 = por %p70, %p71
      %s74 = sadd.s32 %s73, 1
      %p77 = scmp.eq.s32.totalorder %s13, 1
      %p78 = scmp.ne.s32.totalorder %s73, %s75
      %p79 = scmp.eq.s32.totalorder %s13, 0
      %p80 = por %p78, %p79
      %p81 = scmp.ne.s32.totalorder %s73, %s75
      %p82 = scmp.eq.s32.totalorder %s18, 1
      %p83 = por %p81, %p82
      %p84 = scmp.ne.s32.totalorder %s75, %s76
      %p85 = scmp.eq.s32.totalorder %s18, 0
      %p86 = por %p84, %p85
      %p87 = scmp.ne.s32.totalorder %s75, %s76
      %p88 = scmp.eq.s32.totalorder %s19, 1
      %p89 = por %p87, %p88
      %p91 = scmp.ne.s32.totalorder %s76, %s90
      %p92 = scmp.eq.s32.totalorder %s19, 0
      %p93 = por %p91, %p92
      %s95 = sadd.s32 %s94, 1
      %p98 = scmp.eq.s32.totalorder %s13, 1
      %p99 = scmp.ne.s32.totalorder %s94, %s96
      %p100 = scmp.eq.s32.totalorder %s13, 0
      %p101 = por %p99, %p100
      %p102 = scmp.ne.s32.totalorder %s94, %s96
      %p103 = scmp.eq.s32.totalorder %s18, 1
      %p104 = por %p102, %p103
      %p105 = scmp.ne.s32.totalorder %s96, %s97
      %p106 = scmp.eq.s32.totalorder %s18, 0
      %p107 = por %p105, %p106
      %p108 = scmp.ne.s32.totalorder %s96, %s97
      %p109 = scmp.eq.s32.totalorder %s19, 1
      %p110 = por %p108, %p109
      %p112 = scmp.ne.s32.totalorder %s97, %s111
      %p113 = scmp.eq.s32.totalorder %s19, 0
      %p114 = por %p112, %p113
      %s115 = ssub.s32 %s13, %s20
      %p116 = scmp.eq.s32.totalorder %s115, 0
      %s118 = sadd.s32 %s117, 1
      %s119 = scalar_select %p116, %s117, %s118
      %p122 = pneg %p116
      %p123 = scmp.eq.s32.totalorder %s13, 1
      %p124 = por %p122, %p123
      %p125 = scmp.ne.s32.totalorder %s117, %s120
      %p126 = scmp.eq.s32.totalorder %s13, 0
      %p127 = por %p125, %p126
      %p128 = scmp.ne.s32.totalorder %s117, %s120
      %p129 = scmp.eq.s32.totalorder %s18, 1
      %p130 = por %p128, %p129
      %p131 = scmp.ne.s32.totalorder %s120, %s121
      %p132 = scmp.eq.s32.totalorder %s18, 0
      %p133 = por %p131, %p132
      %p134 = scmp.ne.s32.totalorder %s120, %s121
      %p135 = scmp.eq.s32.totalorder %s19, 1
      %p136 = por %p134, %p135
      %p138 = scmp.ne.s32.totalorder %s121, %s137
      %p139 = scmp.eq.s32.totalorder %s19, 0
      %p140 = por %p138, %p139
      %p141 = scmp.le.s32.totalorder 1, %s13
      %p142 = scmp.lt.s32.totalorder %s13, 3
      %p143 = pnand %p141, %p142
      %p144 = pneg %p143
      // Predicated region
      $region9: #{tpu_custom_call.1} parent=5 // pred_check
        _
      $region10: #{tpu_custom_call.1} parent=5 // pred_check_branch
        %146 = sbr.rel (%p143) target = $region12
      $region11: #{tpu_custom_call.1} parent=5 // pred_region
        %s147 = ssub.s32 %s13, 1
        // Predicated region
        $region13: #{tpu_custom_call.1} parent=11 // pred_check
          %p148 = pneg %p86
        $region14: #{tpu_custom_call.1} parent=11 // pred_check_branch
          %150 = sbr.rel (%p148) target = $region16
        $region15: #{tpu_custom_call.1} parent=11 // pred_region
          _
        $region16: #{tpu_custom_call.1} parent=11 // pred_fallthru
          _
        // Predicated region
        $region17: #{tpu_custom_call.1} parent=11 // pred_check
          %p151 = pneg %p107
        $region18: #{tpu_custom_call.1} parent=11 // pred_check_branch
          %153 = sbr.rel (%p151) target = $region20
        $region19: #{tpu_custom_call.1} parent=11 // pred_region
          _
        $region20: #{tpu_custom_call.1} parent=11 // pred_fallthru
          _
      $region12: #{tpu_custom_call.1} parent=5 // pred_fallthru
        _
      %p154 = scmp.lt.s32.totalorder %s13, 2
      // Predicated region
      $region21: #{tpu_custom_call.1} parent=5 // pred_check
        %p155 = pneg %p154
      $region22: #{tpu_custom_call.1} parent=5 // pred_check_branch
        %157 = sbr.rel (%p155) target = $region24
      $region23: #{tpu_custom_call.1} parent=5 // pred_region
        // Predicated region
        $region25: #{tpu_custom_call.1} parent=23 // pred_check
          %p158 = pneg %p33
        $region26: #{tpu_custom_call.1} parent=23 // pred_check_branch
          %160 = sbr.rel (%p158) target = $region28
        $region27: #{tpu_custom_call.1} parent=23 // pred_region
          %s161 = smul.u32 8, %s13
          %p162 = scmp.lt.s32.totalorder %s161, 15
          %s163 = scalar_select %p162, %s161, 15
          %s164 = smul.addr %s163, 8
          %s165 = scalar_lea.vmem %s0, %s164
          %s166 = smul.u32 8, %s13
        $region28: #{tpu_custom_call.1} parent=23 // pred_fallthru
          _
        // Predicated region
        $region29: #{tpu_custom_call.1} parent=23 // pred_check
          %p167 = pneg %p59
        $region30: #{tpu_custom_call.1} parent=23 // pred_check_branch
          %169 = sbr.rel (%p167) target = $region32
        $region31: #{tpu_custom_call.1} parent=23 // pred_region
          %p170 = scmp.lt.s32.totalorder %s13, 1
          %s171 = scalar_select %p170, %s13, 1
          %s172 = smul.addr %s171, 8
          %s173 = scalar_lea.vmem %s1, %s172
        $region32: #{tpu_custom_call.1} parent=23 // pred_fallthru
          _
      $region24: #{tpu_custom_call.1} parent=5 // pred_fallthru
        _
      %p174 = scmp.le.s32.totalorder 1, %s13
      %p175 = scmp.lt.s32.totalorder %s13, 3
      %p176 = pnand %p174, %p175
      %p177 = pneg %p176
      // Predicated region
      $region33: #{tpu_custom_call.1} parent=5 // pred_check
        _
      $region34: #{tpu_custom_call.1} parent=5 // pred_check_branch
        %179 = sbr.rel (%p176) target = $region36
      $region35: #{tpu_custom_call.1} parent=5 // pred_region
        %s180 = ssub.s32 %s13, 1
        %s181 = smul.u32 8, %s18
        %p182 = scmp.lt.s32.totalorder %s181, 15
        %s183 = scalar_select %p182, %s181, 15
        %s184 = smul.addr %s183, 8
        %s185 = scalar_lea.vmem %s0, %s184
        %p186 = pneg %p39
        %p187 = pneg %p36
        %p188 = scmp.lt.s32.totalorder %s18, 1
        %s189 = scalar_select %p188, %s18, 1
        %s190 = smul.addr %s189, 8
        %s191 = scalar_lea.vmem %s1, %s190
        %p192 = pneg %p65
        %p193 = pneg %p62
        %p194 = pneg %p86
        %p195 = pneg %p83
        %p196 = pneg %p107
        %p197 = pneg %p104
        %p198 = pneg %p133
        %p199 = pneg %p130
        %s200 = sand.u32 %s120, 1
        %s201 = scalar_lea.sflag [#allocation3], %s200
        %s202 = sand.u32 %s120, 1
        %s203 = smul.addr %s202, 8
        %s204 = scalar_lea.vmem [#allocation2], %s203
        %s205 = smul.u32 8, %s18
        %p206 = scmp.lt.s32.totalorder %s205, 15
        %s207 = scalar_select %p206, %s205, 15
        %s208 = smul.addr %s207, 8
        %s209 = scalar_lea.vmem %s0, %s208
        %s210 = smul.u32 8, %s18
        %p211 = scmp.lt.s32.totalorder %s18, 1
        %s212 = scalar_select %p211, %s18, 1
        %s213 = smul.addr %s212, 8
        %s214 = scalar_lea.vmem %s1, %s213
        %v215 = vld [vmem:[%s209] sm:$0xff]
        %v216 = vld [vmem:[%s209 + $0x8] sm:$0xff]
        %v217 = vld [vmem:[%s209 + $0x10] sm:$0xff]
        %v218 = vld [vmem:[%s209 + $0x18] sm:$0xff]
        %v219 = vld [vmem:[%s209 + $0x20] sm:$0xff]
        %v220 = vld [vmem:[%s209 + $0x28] sm:$0xff]
        %v221 = vld [vmem:[%s209 + $0x30] sm:$0xff]
        %v222 = vld [vmem:[%s209 + $0x38] sm:$0xff]
        %v223 = vld [vmem:[%s214] sm:$0xff]
        %v224 = vld [vmem:[%s2] sm:$0xff]
        %v225 = vld [vmem:[%s2 + $0x8] sm:$0xff]
        %v226 = vld [vmem:[%s2 + $0x10] sm:$0xff]
        %v227 = vld [vmem:[%s2 + $0x18] sm:$0xff]
        %v228 = vld [vmem:[%s2 + $0x20] sm:$0xff]
        %v229 = vld [vmem:[%s2 + $0x28] sm:$0x1]
        %v230 = vld [vmem:[%s2 + $0x30] sm:$0xff]
        %v231 = vld [vmem:[%s2 + $0x38] sm:$0xff]
        %v232 = vld [vmem:[%s2 + $0x40] sm:$0xff]
        %v233 = vld [vmem:[%s2 + $0x48] sm:$0xff]
        %v234 = vld [vmem:[%s2 + $0x50] sm:$0xff]
        %v235 = vld [vmem:[%s2 + $0x58] sm:$0xff]
        %v236 = vld [vmem:[%s2 + $0x60] sm:$0xff]
        %v237 = vld [vmem:[%s2 + $0x68] sm:$0xff]
        %v238 = vld [vmem:[%s2 + $0x70] sm:$0x1]
        %v239 = vld [vmem:[%s3] sm:$0xff]
        %v240 = vld [vmem:[%s3 + $0x8] sm:$0xff]
        %v241 = vld [vmem:[%s3 + $0x10] sm:$0xff]
        %v242 = vld [vmem:[%s3 + $0x18] sm:$0xff]
        %v243 = vld [vmem:[%s3 + $0x20] sm:$0x1]
        %vm244 = vcmask 64512
        %v246 = vsel %vm244, %v215, 0
        %v249 = vsel %vm244, %v216, 0
        %v252 = vsel %vm244, %v217, 0
        %v255 = vsel %vm244, %v218, 0
        %v258 = vsel %vm244, %v219, 0
        %v261 = vsel %vm244, %v220, 0
        %v264 = vsel %vm244, %v221, 0
        %v267 = vsel %vm244, %v222, 0
        %269 = vmatprep.subr.mxu0 0.0
        %270 = vmatpush1.msra.mxu0 %v224
        %271 = vmatprep.subr.mxu0 0.0
        %272 = vmatpush1.msra.mxu0 0.0
        %273 = vmatprep.subr.mxu0 0.0
        %274 = vmatpush1.msra.mxu0 0.0
        %275 = vmatprep.subr.mxu0 0.0
        %276 = vmatpush1.msra.mxu0 0.0
        %277 = vmatprep.subr.mxu0 0.0
        %278 = vmatpush1.msra.mxu0 0.0
        %279 = vmatprep.subr.mxu0 0.0
        %280 = vmatpush1.msra.mxu0 0.0
        %281 = vmatprep.subr.mxu0 0.0
        %282 = vmatpush1.msra.mxu0 0.0
        %283 = vmatprep.subr.mxu0 0.0
        %284 = vmatpush1.msra.mxu0 0.0
        %285 = vmatprep.subr.mxu0 0.0
        %286 = vmatpush1.msra.mxu0 0.0
        %287 = vmatprep.subr.mxu0 0.0
        %288 = vmatpush1.msra.mxu0 0.0
        %289 = vmatprep.subr.mxu0 0.0
        %290 = vmatpush1.msra.mxu0 0.0
        %291 = vmatprep.subr.mxu0 0.0
        %292 = vmatpush1.msra.mxu0 0.0
        %293 = vmatprep.subr.mxu0 0.0
        %294 = vmatpush1.msra.mxu0 0.0
        %295 = vmatprep.subr.mxu0 0.0
        %296 = vmatpush1.msra.mxu0 0.0
        %297 = vmatprep.subr.mxu0 0.0
        %298 = vmatpush1.msra.mxu0 0.0
        %299 = vmatprep.subr.mxu0 0.0
        %300 = vmatpush1.msra.mxu0 0.0
        %301 = vmatprep.subr.mxu0 0.0
        %302 = vmatpush1.msra.mxu0 0.0
        %303 = vmatprep.subr.mxu0 0.0
        %304 = vmatpush1.msra.mxu0 0.0
        %305 = vmatprep.subr.mxu0 0.0
        %306 = vmatpush1.msra.mxu0 0.0
        %307 = vmatprep.subr.mxu0 0.0
        %308 = vmatpush1.msra.mxu0 0.0
        %309 = vmatprep.subr.mxu0 0.0
        %310 = vmatpush1.msra.mxu0 0.0
        %311 = vmatprep.subr.mxu0 0.0
        %312 = vmatpush1.msra.mxu0 0.0
        %313 = vmatprep.subr.mxu0 0.0
        %314 = vmatpush1.msra.mxu0 0.0
        %315 = vmatprep.subr.mxu0 0.0
        %316 = vmatpush1.msra.mxu0 0.0
        %317 = vmatprep.subr.mxu0 0.0
        %318 = vmatpush1.msra.mxu0 0.0
        %319 = vmatprep.subr.mxu0 0.0
        %320 = vmatpush1.msra.mxu0 0.0
        %321 = vmatprep.subr.mxu0 0.0
        %322 = vmatpush1.msra.mxu0 0.0
        %323 = vmatprep.subr.mxu0 0.0
        %324 = vmatpush1.msra.mxu0 0.0
        %325 = vmatprep.subr.mxu0 0.0
        %326 = vmatpush1.msra.mxu0 0.0
        %327 = vmatprep.subr.mxu0 0.0
        %328 = vmatpush1.msra.mxu0 0.0
        %329 = vmatprep.subr.mxu0 0.0
        %330 = vmatpush1.msra.mxu0 0.0
        %331 = vmatprep.subr.mxu0 0.0
        %332 = vmatpush1.msra.mxu0 0.0
        %333 = vmatprep.mubr.f32.mxu0 0.0
        %334 = vmatmul.mubr.f32.gmra.mrb[0].mxu0 %v246
        %v335 = vpop.f32.mrb[0].mxu0
        %v336 = vadd.f32 0.0, %v335
        %v337 = vpop.f32.mrb[0].mxu0
        %338 = vmatprep.mubr.f32.mxu0 0.0
        %339 = vmatmul.mubr.f32.gmra.mrb[0].mxu0 %v249
        %v340 = vpop.f32.mrb[0].mxu0
        %v341 = vadd.f32 0.0, %v340
        %v342 = vpop.f32.mrb[0].mxu0
        %343 = vmatprep.mubr.f32.mxu0 0.0
        %344 = vmatmul.mubr.f32.gmra.mrb[0].mxu0 %v252
        %v345 = vpop.f32.mrb[0].mxu0
        %v346 = vadd.f32 0.0, %v345
        %v347 = vpop.f32.mrb[0].mxu0
        %348 = vmatprep.mubr.f32.mxu0 0.0
        %349 = vmatmul.mubr.f32.gmra.mrb[0].mxu0 %v255
        %v350 = vpop.f32.mrb[0].mxu0
        %v351 = vadd.f32 0.0, %v350
        %v352 = vpop.f32.mrb[0].mxu0
        %353 = vmatprep.mubr.f32.mxu0 0.0
        %354 = vmatmul.mubr.f32.gmra.mrb[0].mxu0 %v258
        %v355 = vpop.f32.mrb[0].mxu0
        %v356 = vadd.f32 0.0, %v355
        %v357 = vpop.f32.mrb[0].mxu0
        %358 = vmatprep.mubr.f32.mxu0 0.0
        %359 = vmatmul.mubr.f32.gmra.mrb[0].mxu0 %v261
        %v360 = vpop.f32.mrb[0].mxu0
        %v361 = vadd.f32 0.0, %v360
        %v362 = vpop.f32.mrb[0].mxu0
        %363 = vmatprep.mubr.f32.mxu0 0.0
        %364 = vmatmul.mubr.f32.gmra.mrb[0].mxu0 %v264
        %v365 = vpop.f32.mrb[0].mxu0
        %v366 = vadd.f32 0.0, %v365
        %v367 = vpop.f32.mrb[0].mxu0
        %368 = vmatprep.mubr.f32.mxu0 0.0
        %369 = vmatmul.mubr.f32.gmra.mrb[0].mxu0 %v267
        %v370 = vpop.f32.mrb[0].mxu0
        %v371 = vadd.f32 0.0, %v370
        %v372 = vpop.f32.mrb[0].mxu0
        %373 = vdwg.mxu0
        %v374 = vmul.f32 %v336, 0.01
        %v375 = vmul.f32 %v341, 0.01
        %v376 = vmul.f32 %v346, 0.01
        %v377 = vmul.f32 %v351, 0.01
        %v378 = vmul.f32 %v356, 0.01
        %v379 = vmul.f32 %v361, 0.01
        %v380 = vmul.f32 %v366, 0.01
        %v381 = vmul.f32 %v371, 0.01
        %v382 = vmax.f32 %v336, %v374
        %v383 = vmax.f32 %v341, %v375
        %v384 = vmax.f32 %v346, %v376
        %v385 = vmax.f32 %v351, %v377
        %v386 = vmax.f32 %v356, %v378
        %v387 = vmax.f32 %v361, %v379
        %v388 = vmax.f32 %v366, %v380
        %v389 = vmax.f32 %v371, %v381
        %v390 = vlaneseq
        %v391 = vshrl.u32 %v390, 7
        %v392 = vsub.s32 0, %v391
        %v393 = vrot.slane %v229, %v392
        %vm394 = vcmask 261120
        %v396 = vsel %vm394, %v382, 0
        %v399 = vsel %vm394, %v383, 0
        %v402 = vsel %vm394, %v384, 0
        %v405 = vsel %vm394, %v385, 0
        %v408 = vsel %vm394, %v386, 0
        %v411 = vsel %vm394, %v387, 0
        %v414 = vsel %vm394, %v388, 0
        %v417 = vsel %vm394, %v389, 0
        %419 = vmatprep.subr.mxu0 0.0
        %420 = vmatpush1.msra.mxu0 %v225
        %421 = vmatprep.subr.mxu0 0.0
        %422 = vmatpush1.msra.mxu0 %v226
        %423 = vmatprep.subr.mxu0 0.0
        %424 = vmatpush1.msra.mxu0 %v227
        %425 = vmatprep.subr.mxu0 0.0
        %426 = vmatpush1.msra.mxu0 %v228
        %427 = vmatprep.subr.mxu0 0.0
        %428 = vmatpush1.msra.mxu0 0.0
        %429 = vmatprep.subr.mxu0 0.0
        %430 = vmatpush1.msra.mxu0 0.0
        %431 = vmatprep.subr.mxu0 0.0
        %432 = vmatpush1.msra.mxu0 0.0
        %433 = vmatprep.subr.mxu0 0.0
        %434 = vmatpush1.msra.mxu0 0.0
        %435 = vmatprep.subr.mxu0 0.0
        %436 = vmatpush1.msra.mxu0 0.0
        %437 = vmatprep.subr.mxu0 0.0
        %438 = vmatpush1.msra.mxu0 0.0
        %439 = vmatprep.subr.mxu0 0.0
        %440 = vmatpush1.msra.mxu0 0.0
        %441 = vmatprep.subr.mxu0 0.0
        %442 = vmatpush1.msra.mxu0 0.0
        %443 = vmatprep.subr.mxu0 0.0
        %444 = vmatpush1.msra.mxu0 0.0
        %445 = vmatprep.subr.mxu0 0.0
        %446 = vmatpush1.msra.mxu0 0.0
        %447 = vmatprep.subr.mxu0 0.0
        %448 = vmatpush1.msra.mxu0 0.0
        %449 = vmatprep.subr.mxu0 0.0
        %450 = vmatpush1.msra.mxu0 0.0
        %451 = vmatprep.subr.mxu0 0.0
        %452 = vmatpush1.msra.mxu0 0.0
        %453 = vmatprep.subr.mxu0 0.0
        %454 = vmatpush1.msra.mxu0 0.0
        %455 = vmatprep.subr.mxu0 0.0
        %456 = vmatpush1.msra.mxu0 0.0
        %457 = vmatprep.subr.mxu0 0.0
        %458 = vmatpush1.msra.mxu0 0.0
        %459 = vmatprep.subr.mxu0 0.0
        %460 = vmatpush1.msra.mxu0 0.0
        %461 = vmatprep.subr.mxu0 0.0
        %462 = vmatpush1.msra.mxu0 0.0
        %463 = vmatprep.subr.mxu0 0.0
        %464 = vmatpush1.msra.mxu0 0.0
        %465 = vmatprep.subr.mxu0 0.0
        %466 = vmatpush1.msra.mxu0 0.0
        %467 = vmatprep.subr.mxu0 0.0
        %468 = vmatpush1.msra.mxu0 0.0
        %469 = vmatprep.subr.mxu0 0.0
        %470 = vmatpush1.msra.mxu0 0.0
        %471 = vmatprep.subr.mxu0 0.0
        %472 = vmatpush1.msra.mxu0 0.0
        %473 = vmatprep.subr.mxu0 0.0
        %474 = vmatpush1.msra.mxu0 0.0
        %475 = vmatprep.subr.mxu0 0.0
        %476 = vmatpush1.msra.mxu0 0.0
        %477 = vmatprep.subr.mxu0 0.0
        %478 = vmatpush1.msra.mxu0 0.0
        %479 = vmatprep.subr.mxu0 0.0
        %480 = vmatpush1.msra.mxu0 0.0
        %481 = vmatprep.subr.mxu0 0.0
        %482 = vmatpush1.msra.mxu0 0.0
        %483 = vmatprep.mubr.f32.mxu0 0.0
        %484 = vmatmul.mubr.f32.gmra.mrb[0].mxu0 %v396
        %v485 = vpop.f32.mrb[0].mxu0
        %v486 = vadd.f32 %v393, %v485
        %v487 = vpop.f32.mrb[0].mxu0
        %488 = vmatprep.mubr.f32.mxu0 0.0
        %489 = vmatmul.mubr.f32.gmra.mrb[0].mxu0 %v399
        %v490 = vpop.f32.mrb[0].mxu0
        %v491 = vadd.f32 %v393, %v490
        %v492 = vpop.f32.mrb[0].mxu0
        %493 = vmatprep.mubr.f32.mxu0 0.0
        %494 = vmatmul.mubr.f32.gmra.mrb[0].mxu0 %v402
        %v495 = vpop.f32.mrb[0].mxu0
        %v496 = vadd.f32 %v393, %v495
        %v497 = vpop.f32.mrb[0].mxu0
        %498 = vmatprep.mubr.f32.mxu0 0.0
        %499 = vmatmul.mubr.f32.gmra.mrb[0].mxu0 %v405
        %v500 = vpop.f32.mrb[0].mxu0
        %v501 = vadd.f32 %v393, %v500
        %v502 = vpop.f32.mrb[0].mxu0
        %503 = vmatprep.mubr.f32.mxu0 0.0
        %504 = vmatmul.mubr.f32.gmra.mrb[0].mxu0 %v408
        %v505 = vpop.f32.mrb[0].mxu0
        %v506 = vadd.f32 %v393, %v505
        %v507 = vpop.f32.mrb[0].mxu0
        %508 = vmatprep.mubr.f32.mxu0 0.0
        %509 = vmatmul.mubr.f32.gmra.mrb[0].mxu0 %v411
        %v510 = vpop.f32.mrb[0].mxu0
        %v511 = vadd.f32 %v393, %v510
        %v512 = vpop.f32.mrb[0].mxu0
        %513 = vmatprep.mubr.f32.mxu0 0.0
        %514 = vmatmul.mubr.f32.gmra.mrb[0].mxu0 %v414
        %v515 = vpop.f32.mrb[0].mxu0
        %v516 = vadd.f32 %v393, %v515
        %v517 = vpop.f32.mrb[0].mxu0
        %518 = vmatprep.mubr.f32.mxu0 0.0
        %519 = vmatmul.mubr.f32.gmra.mrb[0].mxu0 %v417
        %v520 = vpop.f32.mrb[0].mxu0
        %v521 = vadd.f32 %v393, %v520
        %v522 = vpop.f32.mrb[0].mxu0
        %523 = vdwg.mxu0
        %v524 = vmul.f32 %v486, 0.01
        %v525 = vmul.f32 %v491, 0.01
        %v526 = vmul.f32 %v496, 0.01
        %v527 = vmul.f32 %v501, 0.01
        %v528 = vmul.f32 %v506, 0.01
        %v529 = vmul.f32 %v511, 0.01
        %v530 = vmul.f32 %v516, 0.01
        %v531 = vmul.f32 %v521, 0.01
        %v532 = vmax.f32 %v486, %v524
        %v533 = vmax.f32 %v491, %v525
        %v534 = vmax.f32 %v496, %v526
        %v535 = vmax.f32 %v501, %v527
        %v536 = vmax.f32 %v506, %v528
        %v537 = vmax.f32 %v511, %v529
        %v538 = vmax.f32 %v516, %v530
        %v539 = vmax.f32 %v521, %v531
        %v540 = vlaneseq
        %v541 = vshrl.u32 %v540, 7
        %v542 = vsub.s32 0, %v541
        %v543 = vrot.slane %v223, %v542
        %545 = vbcast.lane.b32.xlu0 %v543, 256
        %v546 = vpop.permute.xlu0 %545
        %v547 = vlaneseq
        %v548 = vshrl.u32 %v547, 7
        %v549 = vsub.s32 1, %v548
        %v550 = vrot.slane %v223, %v549
        %552 = vbcast.lane.b32.xlu0 %v550, 256
        %v553 = vpop.permute.xlu0 %552
        %v554 = vlaneseq
        %v555 = vshrl.u32 %v554, 7
        %v556 = vsub.s32 2, %v555
        %v557 = vrot.slane %v223, %v556
        %559 = vbcast.lane.b32.xlu0 %v557, 256
        %v560 = vpop.permute.xlu0 %559
        %v561 = vlaneseq
        %v562 = vshrl.u32 %v561, 7
        %v563 = vsub.s32 3, %v562
        %v564 = vrot.slane %v223, %v563
        %566 = vbcast.lane.b32.xlu0 %v564, 256
        %v567 = vpop.permute.xlu0 %566
        %v568 = vlaneseq
        %v569 = vshrl.u32 %v568, 7
        %v570 = vsub.s32 4, %v569
        %v571 = vrot.slane %v223, %v570
        %573 = vbcast.lane.b32.xlu0 %v571, 256
        %v574 = vpop.permute.xlu0 %573
        %v575 = vlaneseq
        %v576 = vshrl.u32 %v575, 7
        %v577 = vsub.s32 5, %v576
        %v578 = vrot.slane %v223, %v577
        %580 = vbcast.lane.b32.xlu0 %v578, 256
        %v581 = vpop.permute.xlu0 %580
        %v582 = vlaneseq
        %v583 = vshrl.u32 %v582, 7
        %v584 = vsub.s32 6, %v583
        %v585 = vrot.slane %v223, %v584
        %587 = vbcast.lane.b32.xlu0 %v585, 256
        %v588 = vpop.permute.xlu0 %587
        %v589 = vlaneseq
        %v590 = vshrl.u32 %v589, 7
        %v591 = vsub.s32 7, %v590
        %v592 = vrot.slane %v223, %v591
        %594 = vbcast.lane.b32.xlu0 %v592, 256
        %v595 = vpop.permute.xlu0 %594
        %v596 = vmul.f32 %v532, %v546
        %v597 = vmul.f32 %v533, %v553
        %v598 = vmul.f32 %v534, %v560
        %v599 = vmul.f32 %v535, %v567
        %v600 = vmul.f32 %v536, %v574
        %v601 = vmul.f32 %v537, %v581
        %v602 = vmul.f32 %v538, %v588
        %v603 = vmul.f32 %v539, %v595
        %v604 = vsel %vm394, %v596, 0.0
        %v605 = vrot.slane %v604, 4
        %v606 = vadd.f32 %v604, %v605
        %v607 = vrot.slane %v606, 2
        %v608 = vadd.f32 %v606, %v607
        %v609 = vrot.slane %v608, 1
        %v610 = vadd.f32 %v608, %v609
        %v611 = vsel %vm394, %v597, 0.0
        %v612 = vrot.slane %v611, 4
        %v613 = vadd.f32 %v611, %v612
        %v614 = vrot.slane %v613, 2
        %v615 = vadd.f32 %v613, %v614
        %v616 = vrot.slane %v615, 1
        %v617 = vadd.f32 %v615, %v616
        %v618 = vsel %vm394, %v598, 0.0
        %v619 = vrot.slane %v618, 4
        %v620 = vadd.f32 %v618, %v619
        %v621 = vrot.slane %v620, 2
        %v622 = vadd.f32 %v620, %v621
        %v623 = vrot.slane %v622, 1
        %v624 = vadd.f32 %v622, %v623
        %v625 = vsel %vm394, %v599, 0.0
        %v626 = vrot.slane %v625, 4
        %v627 = vadd.f32 %v625, %v626
        %v628 = vrot.slane %v627, 2
        %v629 = vadd.f32 %v627, %v628
        %v630 = vrot.slane %v629, 1
        %v631 = vadd.f32 %v629, %v630
        %v632 = vsel %vm394, %v600, 0.0
        %v633 = vrot.slane %v632, 4
        %v634 = vadd.f32 %v632, %v633
        %v635 = vrot.slane %v634, 2
        %v636 = vadd.f32 %v634, %v635
        %v637 = vrot.slane %v636, 1
        %v638 = vadd.f32 %v636, %v637
        %v639 = vsel %vm394, %v601, 0.0
        %v640 = vrot.slane %v639, 4
        %v641 = vadd.f32 %v639, %v640
        %v642 = vrot.slane %v641, 2
        %v643 = vadd.f32 %v641, %v642
        %v644 = vrot.slane %v643, 1
        %v645 = vadd.f32 %v643, %v644
        %v646 = vsel %vm394, %v602, 0.0
        %v647 = vrot.slane %v646, 4
        %v648 = vadd.f32 %v646, %v647
        %v649 = vrot.slane %v648, 2
        %v650 = vadd.f32 %v648, %v649
        %v651 = vrot.slane %v650, 1
        %v652 = vadd.f32 %v650, %v651
        %v653 = vsel %vm394, %v603, 0.0
        %v654 = vrot.slane %v653, 4
        %v655 = vadd.f32 %v653, %v654
        %v656 = vrot.slane %v655, 2
        %v657 = vadd.f32 %v655, %v656
        %v658 = vrot.slane %v657, 1
        %v659 = vadd.f32 %v657, %v658
        %v660 = vsel %vm244, %v223, 0.0
        %661 = vadd.xlane.f32.xlu0 %v660
        %v662 = vpop.xlane.xlu0 %661
        %v663 = vrcp.pop %v662
        %v665 = vrot.slane %v663, 1
        %v666 = vrot.slane %v663, 2
        %v667 = vrot.slane %v663, 3
        %v668 = vrot.slane %v663, 4
        %v669 = vrot.slane %v663, 5
        %v670 = vrot.slane %v663, 6
        %v671 = vrot.slane %v663, 7
        %v680 = vmul.f32 %v610, %v663
        %v681 = vmul.f32 %v617, %v665
        %v682 = vmul.f32 %v624, %v666
        %v683 = vmul.f32 %v631, %v667
        %v684 = vmul.f32 %v638, %v668
        %v685 = vmul.f32 %v645, %v669
        %v686 = vmul.f32 %v652, %v670
        %v687 = vmul.f32 %v659, %v671
        %vm696 = vcmask 1041409
        %v697 = vsel %vm696, %v617, %v610
        %vm698 = vcmask 1042434
        %v699 = vsel %vm698, %v624, %v697
        %vm700 = vcmask 1043459
        %v701 = vsel %vm700, %v631, %v699
        %vm702 = vcmask 1044484
        %v703 = vsel %vm702, %v638, %v701
        %vm704 = vcmask 1045509
        %v705 = vsel %vm704, %v645, %v703
        %vm706 = vcmask 1046534
        %v707 = vsel %vm706, %v652, %v705
        %vm708 = vcmask 1047559
        %v709 = vsel %vm708, %v659, %v707
        %v710 = vsel %vm394, %v709, 0
        %712 = vmatprep.subr.mxu0 0.0
        %713 = vmatpush1.msra.mxu0 %v234
        %714 = vmatprep.subr.mxu0 0.0
        %715 = vmatpush1.msra.mxu0 %v235
        %716 = vmatprep.subr.mxu0 0.0
        %717 = vmatpush1.msra.mxu0 %v236
        %718 = vmatprep.subr.mxu0 0.0
        %719 = vmatpush1.msra.mxu0 %v237
        %720 = vmatprep.subr.mxu0 0.0
        %721 = vmatpush1.msra.mxu0 0.0
        %722 = vmatprep.subr.mxu0 0.0
        %723 = vmatpush1.msra.mxu0 0.0
        %724 = vmatprep.subr.mxu0 0.0
        %725 = vmatpush1.msra.mxu0 0.0
        %726 = vmatprep.subr.mxu0 0.0
        %727 = vmatpush1.msra.mxu0 0.0
        %728 = vmatprep.subr.mxu0 0.0
        %729 = vmatpush1.msra.mxu0 0.0
        %730 = vmatprep.subr.mxu0 0.0
        %731 = vmatpush1.msra.mxu0 0.0
        %732 = vmatprep.subr.mxu0 0.0
        %733 = vmatpush1.msra.mxu0 0.0
        %734 = vmatprep.subr.mxu0 0.0
        %735 = vmatpush1.msra.mxu0 0.0
        %736 = vmatprep.subr.mxu0 0.0
        %737 = vmatpush1.msra.mxu0 0.0
        %738 = vmatprep.subr.mxu0 0.0
        %739 = vmatpush1.msra.mxu0 0.0
        %740 = vmatprep.subr.mxu0 0.0
        %741 = vmatpush1.msra.mxu0 0.0
        %742 = vmatprep.subr.mxu0 0.0
        %743 = vmatpush1.msra.mxu0 0.0
        %744 = vmatprep.subr.mxu0 0.0
        %745 = vmatpush1.msra.mxu0 0.0
        %746 = vmatprep.subr.mxu0 0.0
        %747 = vmatpush1.msra.mxu0 0.0
        %748 = vmatprep.subr.mxu0 0.0
        %749 = vmatpush1.msra.mxu0 0.0
        %750 = vmatprep.subr.mxu0 0.0
        %751 = vmatpush1.msra.mxu0 0.0
        %752 = vmatprep.subr.mxu0 0.0
        %753 = vmatpush1.msra.mxu0 0.0
        %754 = vmatprep.subr.mxu0 0.0
        %755 = vmatpush1.msra.mxu0 0.0
        %756 = vmatprep.subr.mxu0 0.0
        %757 = vmatpush1.msra.mxu0 0.0
        %758 = vmatprep.subr.mxu0 0.0
        %759 = vmatpush1.msra.mxu0 0.0
        %760 = vmatprep.subr.mxu0 0.0
        %761 = vmatpush1.msra.mxu0 0.0
        %762 = vmatprep.subr.mxu0 0.0
        %763 = vmatpush1.msra.mxu0 0.0
        %764 = vmatprep.subr.mxu0 0.0
        %765 = vmatpush1.msra.mxu0 0.0
        %766 = vmatprep.subr.mxu0 0.0
        %767 = vmatpush1.msra.mxu0 0.0
        %768 = vmatprep.subr.mxu0 0.0
        %769 = vmatpush1.msra.mxu0 0.0
        %770 = vmatprep.subr.mxu0 0.0
        %771 = vmatpush1.msra.mxu0 0.0
        %772 = vmatprep.subr.mxu0 0.0
        %773 = vmatpush1.msra.mxu0 0.0
        %774 = vmatprep.subr.mxu0 0.0
        %775 = vmatpush1.msra.mxu0 0.0
        %776 = vmatprep.mubr.f32.mxu0 0.0
        %777 = vmatmul.mubr.f32.gmra.mrb[0].mxu0 %v710
        %v778 = vpop.f32.mrb[0].mxu0
        %v779 = vadd.f32 0.0, %v778
        %v780 = vpop.f32.mrb[0].mxu0
        %781 = vdwg.mxu0
        %v790 = vrot.slane %v681, 7
        %v791 = vsel %vm696, %v790, %v680
        %v792 = vrot.slane %v682, 6
        %v793 = vsel %vm698, %v792, %v791
        %v794 = vrot.slane %v683, 5
        %v795 = vsel %vm700, %v794, %v793
        %v796 = vrot.slane %v684, 4
        %v797 = vsel %vm702, %v796, %v795
        %v798 = vrot.slane %v685, 3
        %v799 = vsel %vm704, %v798, %v797
        %v800 = vrot.slane %v686, 2
        %v801 = vsel %vm706, %v800, %v799
        %v802 = vrot.slane %v687, 1
        %v803 = vsel %vm708, %v802, %v801
        %v804 = vsel %vm394, %v803, 0
        %806 = vmatprep.subr.mxu0 0.0
        %807 = vmatpush1.msra.mxu0 %v230
        %808 = vmatprep.subr.mxu0 0.0
        %809 = vmatpush1.msra.mxu0 %v231
        %810 = vmatprep.subr.mxu0 0.0
        %811 = vmatpush1.msra.mxu0 %v232
        %812 = vmatprep.subr.mxu0 0.0
        %813 = vmatpush1.msra.mxu0 %v233
        %814 = vmatprep.subr.mxu0 0.0
        %815 = vmatpush1.msra.mxu0 0.0
        %816 = vmatprep.subr.mxu0 0.0
        %817 = vmatpush1.msra.mxu0 0.0
        %818 = vmatprep.subr.mxu0 0.0
        %819 = vmatpush1.msra.mxu0 0.0
        %820 = vmatprep.subr.mxu0 0.0
        %821 = vmatpush1.msra.mxu0 0.0
        %822 = vmatprep.subr.mxu0 0.0
        %823 = vmatpush1.msra.mxu0 0.0
        %824 = vmatprep.subr.mxu0 0.0
        %825 = vmatpush1.msra.mxu0 0.0
        %826 = vmatprep.subr.mxu0 0.0
        %827 = vmatpush1.msra.mxu0 0.0
        %828 = vmatprep.subr.mxu0 0.0
        %829 = vmatpush1.msra.mxu0 0.0
        %830 = vmatprep.subr.mxu0 0.0
        %831 = vmatpush1.msra.mxu0 0.0
        %832 = vmatprep.subr.mxu0 0.0
        %833 = vmatpush1.msra.mxu0 0.0
        %834 = vmatprep.subr.mxu0 0.0
        %835 = vmatpush1.msra.mxu0 0.0
        %836 = vmatprep.subr.mxu0 0.0
        %837 = vmatpush1.msra.mxu0 0.0
        %838 = vmatprep.subr.mxu0 0.0
        %839 = vmatpush1.msra.mxu0 0.0
        %840 = vmatprep.subr.mxu0 0.0
        %841 = vmatpush1.msra.mxu0 0.0
        %842 = vmatprep.subr.mxu0 0.0
        %843 = vmatpush1.msra.mxu0 0.0
        %844 = vmatprep.subr.mxu0 0.0
        %845 = vmatpush1.msra.mxu0 0.0
        %846 = vmatprep.subr.mxu0 0.0
        %847 = vmatpush1.msra.mxu0 0.0
        %848 = vmatprep.subr.mxu0 0.0
        %849 = vmatpush1.msra.mxu0 0.0
        %850 = vmatprep.subr.mxu0 0.0
        %851 = vmatpush1.msra.mxu0 0.0
        %852 = vmatprep.subr.mxu0 0.0
        %853 = vmatpush1.msra.mxu0 0.0
        %854 = vmatprep.subr.mxu0 0.0
        %855 = vmatpush1.msra.mxu0 0.0
        %856 = vmatprep.subr.mxu0 0.0
        %857 = vmatpush1.msra.mxu0 0.0
        %858 = vmatprep.subr.mxu0 0.0
        %859 = vmatpush1.msra.mxu0 0.0
        %860 = vmatprep.subr.mxu0 0.0
        %861 = vmatpush1.msra.mxu0 0.0
        %862 = vmatprep.subr.mxu0 0.0
        %863 = vmatpush1.msra.mxu0 0.0
        %864 = vmatprep.subr.mxu0 0.0
        %865 = vmatpush1.msra.mxu0 0.0
        %866 = vmatprep.subr.mxu0 0.0
        %867 = vmatpush1.msra.mxu0 0.0
        %868 = vmatprep.subr.mxu0 0.0
        %869 = vmatpush1.msra.mxu0 0.0
        %870 = vmatprep.mubr.f32.mxu0 0.0
        %871 = vmatmul.mubr.f32.gmra.mrb[0].mxu0 %v804
        %v872 = vpop.f32.mrb[0].mxu0
        %v873 = vadd.f32 %v779, %v872
        %v874 = vpop.f32.mrb[0].mxu0
        %875 = vdwg.mxu0
        %v876 = vlaneseq
        %v877 = vshrl.u32 %v876, 7
        %v878 = vsub.s32 0, %v877
        %v879 = vrot.slane %v238, %v878
        %v880 = vadd.f32 %v873, %v879
        %v881 = vmul.f32 %v880, 0.01
        %v882 = vmax.f32 %v880, %v881
        %v883 = vlaneseq
        %v884 = vshrl.u32 %v883, 7
        %v885 = vsub.s32 0, %v884
        %v886 = vrot.slane %v243, %v885
        %v888 = vsel %vm394, %v882, 0
        %890 = vmatprep.subr.mxu0 0.0
        %891 = vmatpush1.msra.mxu0 %v239
        %892 = vmatprep.subr.mxu0 0.0
        %893 = vmatpush1.msra.mxu0 %v240
        %894 = vmatprep.subr.mxu0 0.0
        %895 = vmatpush1.msra.mxu0 %v241
        %896 = vmatprep.subr.mxu0 0.0
        %897 = vmatpush1.msra.mxu0 %v242
        %898 = vmatprep.subr.mxu0 0.0
        %899 = vmatpush1.msra.mxu0 0.0
        %900 = vmatprep.subr.mxu0 0.0
        %901 = vmatpush1.msra.mxu0 0.0
        %902 = vmatprep.subr.mxu0 0.0
        %903 = vmatpush1.msra.mxu0 0.0
        %904 = vmatprep.subr.mxu0 0.0
        %905 = vmatpush1.msra.mxu0 0.0
        %906 = vmatprep.subr.mxu0 0.0
        %907 = vmatpush1.msra.mxu0 0.0
        %908 = vmatprep.subr.mxu0 0.0
        %909 = vmatpush1.msra.mxu0 0.0
        %910 = vmatprep.subr.mxu0 0.0
        %911 = vmatpush1.msra.mxu0 0.0
        %912 = vmatprep.subr.mxu0 0.0
        %913 = vmatpush1.msra.mxu0 0.0
        %914 = vmatprep.subr.mxu0 0.0
        %915 = vmatpush1.msra.mxu0 0.0
        %916 = vmatprep.subr.mxu0 0.0
        %917 = vmatpush1.msra.mxu0 0.0
        %918 = vmatprep.subr.mxu0 0.0
        %919 = vmatpush1.msra.mxu0 0.0
        %920 = vmatprep.subr.mxu0 0.0
        %921 = vmatpush1.msra.mxu0 0.0
        %922 = vmatprep.subr.mxu0 0.0
        %923 = vmatpush1.msra.mxu0 0.0
        %924 = vmatprep.subr.mxu0 0.0
        %925 = vmatpush1.msra.mxu0 0.0
        %926 = vmatprep.subr.mxu0 0.0
        %927 = vmatpush1.msra.mxu0 0.0
        %928 = vmatprep.subr.mxu0 0.0
        %929 = vmatpush1.msra.mxu0 0.0
        %930 = vmatprep.subr.mxu0 0.0
        %931 = vmatpush1.msra.mxu0 0.0
        %932 = vmatprep.subr.mxu0 0.0
        %933 = vmatpush1.msra.mxu0 0.0
        %934 = vmatprep.subr.mxu0 0.0
        %935 = vmatpush1.msra.mxu0 0.0
        %936 = vmatprep.subr.mxu0 0.0
        %937 = vmatpush1.msra.mxu0 0.0
        %938 = vmatprep.subr.mxu0 0.0
        %939 = vmatpush1.msra.mxu0 0.0
        %940 = vmatprep.subr.mxu0 0.0
        %941 = vmatpush1.msra.mxu0 0.0
        %942 = vmatprep.subr.mxu0 0.0
        %943 = vmatpush1.msra.mxu0 0.0
        %944 = vmatprep.subr.mxu0 0.0
        %945 = vmatpush1.msra.mxu0 0.0
        %946 = vmatprep.subr.mxu0 0.0
        %947 = vmatpush1.msra.mxu0 0.0
        %948 = vmatprep.subr.mxu0 0.0
        %949 = vmatpush1.msra.mxu0 0.0
        %950 = vmatprep.subr.mxu0 0.0
        %951 = vmatpush1.msra.mxu0 0.0
        %952 = vmatprep.subr.mxu0 0.0
        %953 = vmatpush1.msra.mxu0 0.0
        %954 = vmatprep.mubr.f32.mxu0 0.0
        %955 = vmatmul.mubr.f32.gmra.mrb[0].mxu0 %v888
        %v956 = vpop.f32.mrb[0].mxu0
        %v957 = vadd.f32 %v886, %v956
        %v958 = vpop.f32.mrb[0].mxu0
        %959 = vdwg.mxu0
        %v960 = vmul.f32 %v957, 0.01
        %v961 = vmax.f32 %v957, %v960
        %962 = vst [vmem:[%s204] sm:$0xff] %v961
        %s963 = sand.u32 %s120, 1
        %s964 = scalar_lea.sflag [#allocation3], %s963
        %s965 = sand.u32 %s120, 1
        %s966 = smul.addr %s965, 8
        %s967 = scalar_lea.vmem [#allocation2], %s966
        // Predicated region
        $region37: #{tpu_custom_call.1} parent=35 // pred_check
          %p968 = pneg %p130
        $region38: #{tpu_custom_call.1} parent=35 // pred_check_branch
          %970 = sbr.rel (%p968) target = $region40
        $region39: #{tpu_custom_call.1} parent=35 // pred_region
          %s972 = ssub.s32 128, 128
          %973 = vsyncadd %s964, %s972
          %s974 = smul.addr %s18, 128
          %s975 = scalar_lea.hbm %s4, %s974
          %s977 = sshll.u32 %s967, 4
          %s978 = int_to_ptr.vmem [resolvable:$true] %s977
          %980 = dma.vmem_to_hbm [thread:$0]  %s978, 128, %s975, %s964
        $region40: #{tpu_custom_call.1} parent=35 // pred_fallthru
          _
      $region36: #{tpu_custom_call.1} parent=5 // pred_fallthru
        _
      %p981 = scmp.le.s32.totalorder 2, %s13
      // Predicated region
      $region41: #{tpu_custom_call.1} parent=5 // pred_check
        %p982 = pneg %p981
      $region42: #{tpu_custom_call.1} parent=5 // pred_check_branch
        %984 = sbr.rel (%p982) target = $region44
      $region43: #{tpu_custom_call.1} parent=5 // pred_region
        %s985 = ssub.s32 %s13, 2
        // Predicated region
        $region45: #{tpu_custom_call.1} parent=43 // pred_check
          %p986 = pneg %p136
        $region46: #{tpu_custom_call.1} parent=43 // pred_check_branch
          %988 = sbr.rel (%p986) target = $region48
        $region47: #{tpu_custom_call.1} parent=43 // pred_region
          %s989 = sand.u32 %s121, 1
          %s990 = scalar_lea.sflag [#allocation3], %s989
          %s991 = sand.u32 %s121, 1
          %s992 = smul.addr %s991, 8
          %s993 = scalar_lea.vmem [#allocation2], %s992
          %994 = dma.done %s990, 128
        $region48: #{tpu_custom_call.1} parent=43 // pred_fallthru
          _
      $region44: #{tpu_custom_call.1} parent=5 // pred_fallthru
        _
    $region6: #{tpu_custom_call.1} parent=1 // loop_footer
      %s17 = sadd.s32 1, %s13
    $region7: #{tpu_custom_call.1} parent=1 // loop_footer_branch
      %12 = sbr.rel target = $region3
    $region8: #{tpu_custom_call.1} parent=1 // loop_exit
      _
    %995 = vsyncpa [#allocation3], 1
    %s996 = scalar_lea.sflag [#allocation3], 1
    %997 = vsyncpa %s996, 1

</llo_original>
